<compile_context>
chip_gen: v5e
topology: v5e:2x2
jax: 0.10.0
libtpu: 0.0.40
codegen_flags: <defaults>
</compile_context>

<pallas_src>
import jax
import jax.numpy as jnp
from jax import lax
from jax.experimental import pallas as pl
from jax.experimental.pallas import tpu as pltpu

EPSILON = 1e-6
LANE = 128
TARGET_BLOCK_BYTES = 3 << 20   # ~3 MiB input blocks (2-4 MiB sweet spot)
MIN_GRID_STEPS = 8             # keep the pipeline fed and both v7x TCs busy


def _round_up(x, m):
    return (x + m - 1) // m * m


def _pearson_kernel(x_ref, o_ref):
    # x_ref / o_ref: (1, C, TILE_S, 128) VMEM tiles.  C is a leading (untiled)
    # axis, so each channel slice x_ref[0, ci] is a dense (TILE_S, 128) slab.
    c = x_ref.shape[1]
    tile_shape = x_ref.shape[2:]
    inv_c = jnp.float32(1.0 / c)
    unroll = c <= 8

    # Pass 1: channel mean (VMEM re-reads are cheap; kernel is HBM-bound).
    def _sum_body(ci, acc):
        return acc + x_ref[0, ci].astype(jnp.float32)

    sum_x = lax.fori_loop(0, c, _sum_body,
                          jnp.zeros(tile_shape, jnp.float32), unroll=unroll)
    mean = sum_x * inv_c

    # Pass 2: two-pass sum of squares (matches reference; no cancellation).
    def _var_body(ci, acc):
        centered = x_ref[0, ci].astype(jnp.float32) - mean
        return acc + centered * centered

    var_sum = lax.fori_loop(0, c, _var_body,
                            jnp.zeros(tile_shape, jnp.float32), unroll=unroll)
    inv_norm = lax.rsqrt(var_sum + EPSILON)          # EUP rsqrt

    # Pass 3: normalized output, one channel slab at a time.
    @pl.loop(0, c, unroll=unroll)
    def _(ci):
        centered = x_ref[0, ci].astype(jnp.float32) - mean
        o_ref[0, ci] = (centered * inv_norm).astype(o_ref.dtype)


def feature2pearson(feature, *, target_block_bytes=TARGET_BLOCK_BYTES):
    """feature: (B, C, H, W) array. Returns array of same shape/dtype."""
    B, C, H, W = feature.shape
    HW = H * W
    dtype = feature.dtype
    itemsize = jnp.dtype(dtype).itemsize
    pack = max(8, 32 // itemsize)      # native sublane packing: 8 f32 / 16 bf16 / 32 i8
    s_full = pl.cdiv(HW, LANE)
    hw_pad = s_full * LANE

    x = feature.reshape(B, C, HW)
    if hw_pad != HW:
        # Only the <=127-element lane remainder is padded; the ragged s-axis
        # tail is handled by Pallas partial boundary blocks, not padding.
        # TODO(synk): a manual-DMA path could avoid this extra HBM pass for
        # non-128-multiple spatial sizes entirely.
        x = jnp.pad(x, ((0, 0), (0, 0), (0, hw_pad - HW)))
    x = x.reshape(B, C, s_full, LANE)

    # Spatial tile sized to ~target_block_bytes per input block, rounded to the
    # dtype's sublane packing; fall back to the full extent when it fits.
    max_tile_s = max(pack, (target_block_bytes // (C * LANE * itemsize)) // pack * pack)
    tile_s = s_full if s_full <= max_tile_s else max_tile_s

    # Keep >= MIN_GRID_STEPS grid steps where possible so the software pipeline
    # has work in flight and v7x's two TensorCores both get blocks.
    while B * pl.cdiv(s_full, tile_s) < MIN_GRID_STEPS and tile_s > pack:
        halved = _round_up(max(pack, tile_s // 2), pack)
        if halved >= tile_s:
            halved = max(pack, tile_s - pack)
        tile_s = halved

    num_s = pl.cdiv(s_full, tile_s)
    grid = (B, num_s)

    # Real per-step VMEM footprint: in + out double-buffers plus a few f32
    # (TILE_S, 128) intermediate slabs (sum / mean / var / inv_norm / temps).
    block_bytes = C * tile_s * LANE * itemsize
    slab_f32 = tile_s * LANE * 4
    vmem_limit = int(min(64 << 20,
                         max(16 << 20, 4 * block_bytes + 8 * slab_f32 + (2 << 20))))
    # TODO(synk): for extreme C (4*block_bytes near physical VMEM even at
    # tile_s == pack) add a split-C grid axis with VMEM-scratch accumulators.

    total_elems = B * C * s_full * LANE
    cost = pl.CostEstimate(
        flops=5 * total_elems,                       # sums, center, square, scale
        transcendentals=B * s_full * LANE,           # one rsqrt per spatial site
        bytes_accessed=2 * total_elems * itemsize,   # pure HBM streaming
    )

    out = pl.pallas_call(
        _pearson_kernel,
        out_shape=jax.ShapeDtypeStruct((B, C, s_full, LANE), dtype),
        grid_spec=pltpu.PrefetchScalarGridSpec(
            num_scalar_prefetch=0,
            grid=grid,
            in_specs=[pl.BlockSpec((1, C, tile_s, LANE), lambda b, s: (b, 0, s, 0))],
            out_specs=pl.BlockSpec((1, C, tile_s, LANE), lambda b, s: (b, 0, s, 0)),
        ),
        compiler_params=pltpu.CompilerParams(
            dimension_semantics=("parallel", "parallel"),
            vmem_limit_bytes=vmem_limit,
        ),
        cost_estimate=cost,
    )(x)

    out = out.reshape(B, C, hw_pad)
    if hw_pad != HW:
        out = out[:, :, :HW]
    return out.reshape(B, C, H, W)


def _reference(feature):
    feature = feature.astype(jnp.float32)
    mean = jnp.mean(feature, axis=1, keepdims=True)
    pearson = feature - mean
    norm = jnp.sqrt(jnp.sum(pearson ** 2, axis=1, keepdims=True) + EPSILON)
    return pearson / norm


if __name__ == "__main__":
    key = jax.random.PRNGKey(0)

    # 1) Lane-aligned case (16*16 = 256 = 2*128): no pad, no slice.
    B, C, H, W = 2, 4, 16, 16
    x = jax.random.normal(key, (B, C, H, W), dtype=jnp.float32)
    out = jax.block_until_ready(feature2pearson(x))
    assert out.shape == (B, C, H, W)
    assert out.dtype == x.dtype
    assert jnp.allclose(out, _reference(x), atol=1e-5, rtol=1e-5)

    # 2) Non-128-multiple spatial size (7x7): only the lane remainder is padded.
    x2 = jax.random.normal(jax.random.PRNGKey(1), (2, 3, 7, 7), dtype=jnp.float32)
    out2 = jax.block_until_ready(feature2pearson(x2))
    assert out2.shape == x2.shape
    assert jnp.allclose(out2, _reference(x2), atol=1e-5, rtol=1e-5)

    # 3) Ragged s-axis tail (48*48 = 18 rows of 128, tile_s forced to 8 -> last
    #    block partial) exercising the in-kernel partial-block path.
    x3 = jax.random.normal(jax.random.PRNGKey(2), (2, 4, 48, 48), dtype=jnp.float32)
    out3 = jax.block_until_ready(
        feature2pearson(x3, target_block_bytes=4 * LANE * 4 * 8))
    assert out3.shape == x3.shape
    assert jnp.allclose(out3, _reference(x3), atol=1e-5, rtol=1e-5)

    print("KERNEL_OK")
</pallas_src>

<mosaic_0001>
module attributes {stable_mosaic.version = 11 : i64} {
  func.func @_pearson_kernel(%arg0: i32, %arg1: i32, %arg2: memref<1x4x2x128xf32, #tpu.memory_space<vmem>>, %arg3: memref<1x4x2x128xf32, #tpu.memory_space<vmem>>) attributes {dimension_semantics = [#tpu.dimension_semantics<parallel>, #tpu.dimension_semantics<parallel>], iteration_bounds = array<i64: 2, 1>, scalar_prefetch = 0 : i64, scratch_operands = 0 : i64, tpu.core_type = #tpu.core_type<tc>, window_params = [{transform_indices = @transform_0, window_bounds = array<i64: 1, 4, 2, 128>}, {transform_indices = @transform_1, window_bounds = array<i64: 1, 4, 2, 128>}]} {
    %cst = arith.constant 0.000000e+00 : f32
    %0 = vector.broadcast %cst : f32 to vector<2x128xf32>
    %c0_i32 = arith.constant 0 : i32
    %c0 = arith.constant 0 : index
    %1 = arith.index_cast %c0_i32 : i32 to index
    %c0_0 = arith.constant 0 : index
    %c0_1 = arith.constant 0 : index
    %2 = vector.load %arg2[%c0, %1, %c0_0, %c0_1] : memref<1x4x2x128xf32, #tpu.memory_space<vmem>>, vector<1x1x2x128xf32>
    %3 = vector.shape_cast %2 : vector<1x1x2x128xf32> to vector<2x128xf32>
    %4 = arith.addf %0, %3 : vector<2x128xf32>
    %c1_i32 = arith.constant 1 : i32
    %c0_2 = arith.constant 0 : index
    %5 = arith.index_cast %c1_i32 : i32 to index
    %c0_3 = arith.constant 0 : index
    %c0_4 = arith.constant 0 : index
    %6 = vector.load %arg2[%c0_2, %5, %c0_3, %c0_4] : memref<1x4x2x128xf32, #tpu.memory_space<vmem>>, vector<1x1x2x128xf32>
    %7 = vector.shape_cast %6 : vector<1x1x2x128xf32> to vector<2x128xf32>
    %8 = arith.addf %4, %7 : vector<2x128xf32>
    %c2_i32 = arith.constant 2 : i32
    %c0_5 = arith.constant 0 : index
    %9 = arith.index_cast %c2_i32 : i32 to index
    %c0_6 = arith.constant 0 : index
    %c0_7 = arith.constant 0 : index
    %10 = vector.load %arg2[%c0_5, %9, %c0_6, %c0_7] : memref<1x4x2x128xf32, #tpu.memory_space<vmem>>, vector<1x1x2x128xf32>
    %11 = vector.shape_cast %10 : vector<1x1x2x128xf32> to vector<2x128xf32>
    %12 = arith.addf %8, %11 : vector<2x128xf32>
    %c3_i32 = arith.constant 3 : i32
    %c0_8 = arith.constant 0 : index
    %13 = arith.index_cast %c3_i32 : i32 to index
    %c0_9 = arith.constant 0 : index
    %c0_10 = arith.constant 0 : index
    %14 = vector.load %arg2[%c0_8, %13, %c0_9, %c0_10] : memref<1x4x2x128xf32, #tpu.memory_space<vmem>>, vector<1x1x2x128xf32>
    %15 = vector.shape_cast %14 : vector<1x1x2x128xf32> to vector<2x128xf32>
    %16 = arith.addf %12, %15 : vector<2x128xf32>
    %c4_i32 = arith.constant 4 : i32
    %cst_11 = arith.constant 2.500000e-01 : f32
    %17 = vector.broadcast %cst_11 : f32 to vector<2x128xf32>
    %18 = arith.mulf %16, %17 : vector<2x128xf32>
    %cst_12 = arith.constant 0.000000e+00 : f32
    %19 = vector.broadcast %cst_12 : f32 to vector<2x128xf32>
    %c0_i32_13 = arith.constant 0 : i32
    %c0_14 = arith.constant 0 : index
    %20 = arith.index_cast %c0_i32_13 : i32 to index
    %c0_15 = arith.constant 0 : index
    %c0_16 = arith.constant 0 : index
    %21 = vector.load %arg2[%c0_14, %20, %c0_15, %c0_16] : memref<1x4x2x128xf32, #tpu.memory_space<vmem>>, vector<1x1x2x128xf32>
    %22 = vector.shape_cast %21 : vector<1x1x2x128xf32> to vector<2x128xf32>
    %23 = arith.subf %22, %18 : vector<2x128xf32>
    %24 = arith.mulf %23, %23 : vector<2x128xf32>
    %25 = arith.addf %19, %24 : vector<2x128xf32>
    %c1_i32_17 = arith.constant 1 : i32
    %c0_18 = arith.constant 0 : index
    %26 = arith.index_cast %c1_i32_17 : i32 to index
    %c0_19 = arith.constant 0 : index
    %c0_20 = arith.constant 0 : index
    %27 = vector.load %arg2[%c0_18, %26, %c0_19, %c0_20] : memref<1x4x2x128xf32, #tpu.memory_space<vmem>>, vector<1x1x2x128xf32>
    %28 = vector.shape_cast %27 : vector<1x1x2x128xf32> to vector<2x128xf32>
    %29 = arith.subf %28, %18 : vector<2x128xf32>
    %30 = arith.mulf %29, %29 : vector<2x128xf32>
    %31 = arith.addf %25, %30 : vector<2x128xf32>
    %c2_i32_21 = arith.constant 2 : i32
    %c0_22 = arith.constant 0 : index
    %32 = arith.index_cast %c2_i32_21 : i32 to index
    %c0_23 = arith.constant 0 : index
    %c0_24 = arith.constant 0 : index
    %33 = vector.load %arg2[%c0_22, %32, %c0_23, %c0_24] : memref<1x4x2x128xf32, #tpu.memory_space<vmem>>, vector<1x1x2x128xf32>
    %34 = vector.shape_cast %33 : vector<1x1x2x128xf32> to vector<2x128xf32>
    %35 = arith.subf %34, %18 : vector<2x128xf32>
    %36 = arith.mulf %35, %35 : vector<2x128xf32>
    %37 = arith.addf %31, %36 : vector<2x128xf32>
    %c3_i32_25 = arith.constant 3 : i32
    %c0_26 = arith.constant 0 : index
    %38 = arith.index_cast %c3_i32_25 : i32 to index
    %c0_27 = arith.constant 0 : index
    %c0_28 = arith.constant 0 : index
    %39 = vector.load %arg2[%c0_26, %38, %c0_27, %c0_28] : memref<1x4x2x128xf32, #tpu.memory_space<vmem>>, vector<1x1x2x128xf32>
    %40 = vector.shape_cast %39 : vector<1x1x2x128xf32> to vector<2x128xf32>
    %41 = arith.subf %40, %18 : vector<2x128xf32>
    %42 = arith.mulf %41, %41 : vector<2x128xf32>
    %43 = arith.addf %37, %42 : vector<2x128xf32>
    %c4_i32_29 = arith.constant 4 : i32
    %cst_30 = arith.constant 9.99999997E-7 : f32
    %44 = vector.broadcast %cst_30 : f32 to vector<2x128xf32>
    %45 = arith.addf %43, %44 : vector<2x128xf32>
    %46 = math.rsqrt %45 : vector<2x128xf32>
    %c0_i32_31 = arith.constant 0 : i32
    %c1_i32_32 = arith.constant 1 : i32
    %47 = arith.muli %c0_i32_31, %c1_i32_32 : i32
    %c0_i32_33 = arith.constant 0 : i32
    %48 = arith.addi %c0_i32_33, %47 : i32
    %c0_34 = arith.constant 0 : index
    %49 = arith.index_cast %48 : i32 to index
    %c0_35 = arith.constant 0 : index
    %c0_36 = arith.constant 0 : index
    %50 = vector.load %arg2[%c0_34, %49, %c0_35, %c0_36] : memref<1x4x2x128xf32, #tpu.memory_space<vmem>>, vector<1x1x2x128xf32>
    %51 = vector.shape_cast %50 : vector<1x1x2x128xf32> to vector<2x128xf32>
    %52 = arith.subf %51, %18 : vector<2x128xf32>
    %53 = arith.mulf %52, %46 : vector<2x128xf32>
    %c0_37 = arith.constant 0 : index
    %54 = arith.index_cast %48 : i32 to index
    %c0_38 = arith.constant 0 : index
    %c0_39 = arith.constant 0 : index
    %55 = vector.load %arg3[%c0_37, %54, %c0_38, %c0_39] : memref<1x4x2x128xf32, #tpu.memory_space<vmem>>, vector<1x1x2x128xf32>
    %56 = vector.shape_cast %55 : vector<1x1x2x128xf32> to vector<2x128xf32>
    %57 = vector.shape_cast %53 : vector<2x128xf32> to vector<1x1x2x128xf32>
    tpu.vector_store %arg3[%c0_37, %54, %c0_38, %c0_39], %57 {strides = array<i32>} : memref<1x4x2x128xf32, #tpu.memory_space<vmem>>, vector<1x1x2x128xf32>,
    %c1_i32_40 = arith.constant 1 : i32
    %c1_i32_41 = arith.constant 1 : i32
    %58 = arith.muli %c1_i32_40, %c1_i32_41 : i32
    %c0_i32_42 = arith.constant 0 : i32
    %59 = arith.addi %c0_i32_42, %58 : i32
    %c0_43 = arith.constant 0 : index
    %60 = arith.index_cast %59 : i32 to index
    %c0_44 = arith.constant 0 : index
    %c0_45 = arith.constant 0 : index
    %61 = vector.load %arg2[%c0_43, %60, %c0_44, %c0_45] : memref<1x4x2x128xf32, #tpu.memory_space<vmem>>, vector<1x1x2x128xf32>
    %62 = vector.shape_cast %61 : vector<1x1x2x128xf32> to vector<2x128xf32>
    %63 = arith.subf %62, %18 : vector<2x128xf32>
    %64 = arith.mulf %63, %46 : vector<2x128xf32>
    %c0_46 = arith.constant 0 : index
    %65 = arith.index_cast %59 : i32 to index
    %c0_47 = arith.constant 0 : index
    %c0_48 = arith.constant 0 : index
    %66 = vector.load %arg3[%c0_46, %65, %c0_47, %c0_48] : memref<1x4x2x128xf32, #tpu.memory_space<vmem>>, vector<1x1x2x128xf32>
    %67 = vector.shape_cast %66 : vector<1x1x2x128xf32> to vector<2x128xf32>
    %68 = vector.shape_cast %64 : vector<2x128xf32> to vector<1x1x2x128xf32>
    tpu.vector_store %arg3[%c0_46, %65, %c0_47, %c0_48], %68 {strides = array<i32>} : memref<1x4x2x128xf32, #tpu.memory_space<vmem>>, vector<1x1x2x128xf32>,
    %c2_i32_49 = arith.constant 2 : i32
    %c1_i32_50 = arith.constant 1 : i32
    %69 = arith.muli %c2_i32_49, %c1_i32_50 : i32
    %c0_i32_51 = arith.constant 0 : i32
    %70 = arith.addi %c0_i32_51, %69 : i32
    %c0_52 = arith.constant 0 : index
    %71 = arith.index_cast %70 : i32 to index
    %c0_53 = arith.constant 0 : index
    %c0_54 = arith.constant 0 : index
    %72 = vector.load %arg2[%c0_52, %71, %c0_53, %c0_54] : memref<1x4x2x128xf32, #tpu.memory_space<vmem>>, vector<1x1x2x128xf32>
    %73 = vector.shape_cast %72 : vector<1x1x2x128xf32> to vector<2x128xf32>
    %74 = arith.subf %73, %18 : vector<2x128xf32>
    %75 = arith.mulf %74, %46 : vector<2x128xf32>
    %c0_55 = arith.constant 0 : index
    %76 = arith.index_cast %70 : i32 to index
    %c0_56 = arith.constant 0 : index
    %c0_57 = arith.constant 0 : index
    %77 = vector.load %arg3[%c0_55, %76, %c0_56, %c0_57] : memref<1x4x2x128xf32, #tpu.memory_space<vmem>>, vector<1x1x2x128xf32>
    %78 = vector.shape_cast %77 : vector<1x1x2x128xf32> to vector<2x128xf32>
    %79 = vector.shape_cast %75 : vector<2x128xf32> to vector<1x1x2x128xf32>
    tpu.vector_store %arg3[%c0_55, %76, %c0_56, %c0_57], %79 {strides = array<i32>} : memref<1x4x2x128xf32, #tpu.memory_space<vmem>>, vector<1x1x2x128xf32>,
    %c3_i32_58 = arith.constant 3 : i32
    %c1_i32_59 = arith.constant 1 : i32
    %80 = arith.muli %c3_i32_58, %c1_i32_59 : i32
    %c0_i32_60 = arith.constant 0 : i32
    %81 = arith.addi %c0_i32_60, %80 : i32
    %c0_61 = arith.constant 0 : index
    %82 = arith.index_cast %81 : i32 to index
    %c0_62 = arith.constant 0 : index
    %c0_63 = arith.constant 0 : index
    %83 = vector.load %arg2[%c0_61, %82, %c0_62, %c0_63] : memref<1x4x2x128xf32, #tpu.memory_space<vmem>>, vector<1x1x2x128xf32>
    %84 = vector.shape_cast %83 : vector<1x1x2x128xf32> to vector<2x128xf32>
    %85 = arith.subf %84, %18 : vector<2x128xf32>
    %86 = arith.mulf %85, %46 : vector<2x128xf32>
    %c0_64 = arith.constant 0 : index
    %87 = arith.index_cast %81 : i32 to index
    %c0_65 = arith.constant 0 : index
    %c0_66 = arith.constant 0 : index
    %88 = vector.load %arg3[%c0_64, %87, %c0_65, %c0_66] : memref<1x4x2x128xf32, #tpu.memory_space<vmem>>, vector<1x1x2x128xf32>
    %89 = vector.shape_cast %88 : vector<1x1x2x128xf32> to vector<2x128xf32>
    %90 = vector.shape_cast %86 : vector<2x128xf32> to vector<1x1x2x128xf32>
    tpu.vector_store %arg3[%c0_64, %87, %c0_65, %c0_66], %90 {strides = array<i32>} : memref<1x4x2x128xf32, #tpu.memory_space<vmem>>, vector<1x1x2x128xf32>,
    %c4_i32_67 = arith.constant 4 : i32
    return
  }
  func.func @transform_0(%arg0: i32, %arg1: i32) -> (i32, i32, i32, i32) {
    %c0_i32 = arith.constant 0 : i32
    %c0_i32_0 = arith.constant 0 : i32
    %c0_i32_1 = arith.constant 0 : i32
    return %arg0, %c0_i32, %arg1, %c0_i32_0 : i32, i32, i32, i32
  }
  func.func @transform_1(%arg0: i32, %arg1: i32) -> (i32, i32, i32, i32) {
    %c0_i32 = arith.constant 0 : i32
    %c0_i32_0 = arith.constant 0 : i32
    %c0_i32_1 = arith.constant 0 : i32
    return %arg0, %c0_i32, %arg1, %c0_i32_0 : i32, i32, i32, i32
  }
}

</mosaic_0001>

<llo_original>
// kernel: tpu_custom_call.1
$region0: #{tpu_custom_call.1}
  #allocation0 [shape = 'u32[]', space=smem, size = 0x4, offset = 0x4, fixed_abs, tag = 'smem constant byte address 0x4 - core index']
  #allocation1 [shape = 'u32[72,128]{1,0:T(1,128)}', space=vmem, size = 0x9000, scoped, tag = 'internal scratch']
  %s0 = inlined_call_operand.hbm [shape: f32[2,4,2,128], index: 0, kind: input, shape index: {}]
  %s1 = inlined_call_operand.hbm [shape: f32[2,4,2,128], index: 1, kind: output, shape index: {}]
  %s2 = sld [smem:[#allocation0]]
  $region41: #{tpu_custom_call.1} parent=0
    _
  %s4 = ssub.s32 1, %s2
  %s5 = scalar_select 0, %s4, %s2
  $region1: #{tpu_custom_call.1} parent=0
    #allocation2 [shape = 'u8[8192]{0}', space=vmem, size = 0x2000, scoped, tag = 'input window, operand 0']
    #allocation3 [shape = 's32[2]{0}', space=sflag, size = 0x8, scoped, tag = 'scoped memory for tpu_custom_call.1']
    #allocation4 [shape = 's32[2]{0}', space=sflag, size = 0x8, scoped, tag = 'scoped memory for tpu_custom_call.1']
    #allocation5 [shape = 'u8[8192]{0}', space=vmem, size = 0x2000, scoped, tag = 'output window, operand 0']
    %6 = vsyncpa [#allocation3], 0
    %s7 = scalar_lea.sflag [#allocation3], 1
    %8 = vsyncpa %s7, 0
    %9 = vsyncpa [#allocation4], 0
    %s10 = scalar_lea.sflag [#allocation4], 1
    %11 = vsyncpa %s10, 0
    loop: start=0, step=1, limit=4
    $region2: #{tpu_custom_call.1} parent=1 // loop_pre_header
      _
    $region3: #{tpu_custom_call.1} parent=1 // loop_header
      %s13 = sphi 0, %s17
      %p14 = scmp.ge.s32.totalorder %s13, 4
      %s20 = sphi 0, %s32
      %s21 = sphi 0, %s28
      %s22 = sphi 0, %s20
      %s23 = sphi 0, %s21
      %s24 = sphi 0, %s22
      %s25 = sphi 0, %s23
      %s37 = sphi 0, %s39
      %s40 = sphi 0, %s37
      %s41 = sphi 0, %s40
      %s57 = sphi 0, %s41
      %s65 = sphi 0, %s67
      %s68 = sphi 0, %s65
      %s69 = sphi 0, %s68
      %s85 = sphi 0, %s69
    $region4: #{tpu_custom_call.1} parent=1 // loop_header_branch
      %16 = sbr.rel (%p14) target = $region8
    $region5: #{tpu_custom_call.1} parent=1 // loop_body
      %s18 = ssub.s32 %s13, 1
      %s19 = ssub.s32 %s13, 2
      %s26 = sadd.s32 1, %s21
      %p27 = scmp.ge.s32.totalorder %s26, 1
      %s28 = scalar_select %p27, 0, %s26
      %s29 = sadd.s32 1, %s20
      %s30 = scalar_select %p27, %s29, %s20
      %p31 = scmp.ge.s32.totalorder %s30, 2
      %s32 = scalar_select %p31, 0, %s30
      %s33 = ssub.s32 %s20, %s32
      %s34 = ssub.s32 %s21, %s28
      %s35 = sor.u32 %s33, %s34
      %p36 = scmp.eq.s32.totalorder %s35, 0
      %s38 = sadd.s32 %s37, 1
      %s39 = scalar_select %p36, %s37, %s38
      %p42 = pneg %p36
      %p43 = scmp.eq.s32.totalorder %s13, 1
      %p44 = por %p42, %p43
      %p45 = scmp.ne.s32.totalorder %s37, %s40
      %p46 = scmp.eq.s32.totalorder %s13, 0
      %p47 = por %p45, %p46
      %p48 = scmp.ne.s32.totalorder %s37, %s40
      %p49 = scmp.eq.s32.totalorder %s18, 1
      %p50 = por %p48, %p49
      %p51 = scmp.ne.s32.totalorder %s40, %s41
      %p52 = scmp.eq.s32.totalorder %s18, 0
      %p53 = por %p51, %p52
      %p54 = scmp.ne.s32.totalorder %s40, %s41
      %p55 = scmp.eq.s32.totalorder %s19, 1
      %p56 = por %p54, %p55
      %p58 = scmp.ne.s32.totalorder %s41, %s57
      %p59 = scmp.eq.s32.totalorder %s19, 0
      %p60 = por %p58, %p59
      %s61 = ssub.s32 %s20, %s32
      %s62 = ssub.s32 %s21, %s28
      %s63 = sor.u32 %s61, %s62
      %p64 = scmp.eq.s32.totalorder %s63, 0
      %s66 = sadd.s32 %s65, 1
      %s67 = scalar_select %p64, %s65, %s66
      %p70 = pneg %p64
      %p71 = scmp.eq.s32.totalorder %s13, 1
      %p72 = por %p70, %p71
      %p73 = scmp.ne.s32.totalorder %s65, %s68
      %p74 = scmp.eq.s32.totalorder %s13, 0
      %p75 = por %p73, %p74
      %p76 = scmp.ne.s32.totalorder %s65, %s68
      %p77 = scmp.eq.s32.totalorder %s18, 1
      %p78 = por %p76, %p77
      %p79 = scmp.ne.s32.totalorder %s68, %s69
      %p80 = scmp.eq.s32.totalorder %s18, 0
      %p81 = por %p79, %p80
      %p82 = scmp.ne.s32.totalorder %s68, %s69
      %p83 = scmp.eq.s32.totalorder %s19, 1
      %p84 = por %p82, %p83
      %p86 = scmp.ne.s32.totalorder %s69, %s85
      %p87 = scmp.eq.s32.totalorder %s19, 0
      %p88 = por %p86, %p87
      %p89 = scmp.le.s32.totalorder 1, %s13
      %p90 = scmp.lt.s32.totalorder %s13, 3
      %p91 = pnand %p89, %p90
      %p92 = pneg %p91
      // Predicated region
      $region9: #{tpu_custom_call.1} parent=5 // pred_check
        _
      $region10: #{tpu_custom_call.1} parent=5 // pred_check_branch
        %94 = sbr.rel (%p91) target = $region12
      $region11: #{tpu_custom_call.1} parent=5 // pred_region
        %s95 = ssub.s32 %s13, 1
      $region12: #{tpu_custom_call.1} parent=5 // pred_fallthru
        _
      %p96 = scmp.lt.s32.totalorder %s13, 2
      // Predicated region
      $region13: #{tpu_custom_call.1} parent=5 // pred_check
        %p97 = pneg %p96
      $region14: #{tpu_custom_call.1} parent=5 // pred_check_branch
        %99 = sbr.rel (%p97) target = $region16
      $region15: #{tpu_custom_call.1} parent=5 // pred_region
        // Predicated region
        $region17: #{tpu_custom_call.1} parent=15 // pred_check
          %p100 = pneg %p47
        $region18: #{tpu_custom_call.1} parent=15 // pred_check_branch
          %102 = sbr.rel (%p100) target = $region20
        $region19: #{tpu_custom_call.1} parent=15 // pred_region
          %s103 = sand.u32 %s37, 1
          %s104 = scalar_lea.sflag [#allocation3], %s103
          %s105 = sand.u32 %s37, 1
          %s106 = smul.addr %s105, 8
          %s107 = scalar_lea.vmem [#allocation2], %s106
          %109 = vsyncadd %s104, 0
          %s110 = smul.addr %s20, 4
          %s111 = sadd.s32 %s21, %s110
          %s112 = smul.addr %s111, 2
          %s113 = scalar_lea.hbm %s0, %s112
          %s114 = sshll.u32 %s113, 4
          %s115 = int_to_ptr.hbm [resolvable:$true] %s114
          %s116 = sshll.u32 %s107, 4
          %s117 = int_to_ptr.vmem [resolvable:$true] %s116
          %122 = dma.hbm_to_vmem [thread:$0]  %s115, 128, %s117, %s104, 32, 32, 2
        $region20: #{tpu_custom_call.1} parent=15 // pred_fallthru
          _
      $region16: #{tpu_custom_call.1} parent=5 // pred_fallthru
        _
      %p123 = scmp.le.s32.totalorder 1, %s13
      %p124 = scmp.lt.s32.totalorder %s13, 3
      %p125 = pnand %p123, %p124
      %p126 = pneg %p125
      // Predicated region
      $region21: #{tpu_custom_call.1} parent=5 // pred_check
        _
      $region22: #{tpu_custom_call.1} parent=5 // pred_check_branch
        %128 = sbr.rel (%p125) target = $region24
      $region23: #{tpu_custom_call.1} parent=5 // pred_region
        %s129 = ssub.s32 %s13, 1
        %s130 = sand.u32 %s40, 1
        %s131 = scalar_lea.sflag [#allocation3], %s130
        %s132 = sand.u32 %s40, 1
        %s133 = smul.addr %s132, 8
        %s134 = scalar_lea.vmem [#allocation2], %s133
        // Predicated region
        $region25: #{tpu_custom_call.1} parent=23 // pred_check
          %p135 = pneg %p53
        $region26: #{tpu_custom_call.1} parent=23 // pred_check_branch
          %137 = sbr.rel (%p135) target = $region28
        $region27: #{tpu_custom_call.1} parent=23 // pred_region
          %139 = dma.done %s131, 128
        $region28: #{tpu_custom_call.1} parent=23 // pred_fallthru
          _
        %s140 = sand.u32 %s40, 1
        %s141 = scalar_lea.sflag [#allocation3], %s140
        %s142 = sand.u32 %s40, 1
        %s143 = smul.addr %s142, 8
        %s144 = scalar_lea.vmem [#allocation2], %s143
        %p145 = pneg %p53
        %p146 = pneg %p50
        %p147 = pneg %p81
        %p148 = pneg %p78
        %s149 = sand.u32 %s68, 1
        %s150 = scalar_lea.sflag [#allocation4], %s149
        %s151 = sand.u32 %s68, 1
        %s152 = smul.addr %s151, 8
        %s153 = scalar_lea.vmem [#allocation5], %s152
        %v154 = vld [vmem:[%s134] sm:$0x3]
        %v155 = vadd.f32 %v154, 0.0
        %s156 = scalar_lea.vmem %s134, 2 [#allocation2]
        %v157 = vld [vmem:[%s156] sm:$0x3]
        %v158 = vadd.f32 %v155, %v157
        %s159 = scalar_lea.vmem %s134, 4 [#allocation2]
        %v160 = vld [vmem:[%s159] sm:$0x3]
        %v161 = vadd.f32 %v158, %v160
        %s162 = scalar_lea.vmem %s134, 6 [#allocation2]
        %v163 = vld [vmem:[%s162] sm:$0x3]
        %v164 = vadd.f32 %v161, %v163
        %v165 = vmul.f32 %v164, 0.25
        %v166 = vsub.f32 %v154, %v165
        %v167 = vmul.f32 %v166, %v166
        %v168 = vadd.f32 %v167, 0.0
        %v169 = vsub.f32 %v157, %v165
        %v170 = vmul.f32 %v169, %v169
        %v171 = vadd.f32 %v168, %v170
        %v172 = vsub.f32 %v160, %v165
        %v173 = vmul.f32 %v172, %v172
        %v174 = vadd.f32 %v171, %v173
        %v175 = vsub.f32 %v163, %v165
        %v176 = vmul.f32 %v175, %v175
        %v177 = vadd.f32 %v174, %v176
        %v178 = vadd.f32 %v177, 1e-06
        %v179 = vrsqrt.pop %v178
        %v180 = vmul.f32 %v179, %v178
        %v181 = vmul.f32 %v180, %v179
        %v182 = vmul.f32 0.5, %v181
        %v183 = vsub.f32 1.5, %v182
        %v184 = vmul.f32 %v179, %v183
        %vm185 = vweird.f32 %v178
        %vm186 = vweird.f32 %v179
        %vm187 = vmor %vm185, %vm186
        %v188 = vsel %vm187, %v179, %v184
        %v189 = vmul.f32 %v166, %v188
        %190 = vst [vmem:[%s153] sm:$0x3] %v189
        %v191 = vld [vmem:[%s156] sm:$0x3]
        %v192 = vsub.f32 %v191, %v165
        %v193 = vmul.f32 %v192, %v188
        %s194 = scalar_lea.vmem %s153, 2 [#allocation5]
        %195 = vst [vmem:[%s194] sm:$0x3] %v193
        %v196 = vld [vmem:[%s159] sm:$0x3]
        %v197 = vsub.f32 %v196, %v165
        %v198 = vmul.f32 %v197, %v188
        %s199 = scalar_lea.vmem %s153, 4 [#allocation5]
        %200 = vst [vmem:[%s199] sm:$0x3] %v198
        %v201 = vld [vmem:[%s162] sm:$0x3]
        %v202 = vsub.f32 %v201, %v165
        %v203 = vmul.f32 %v202, %v188
        %s204 = scalar_lea.vmem %s153, 6 [#allocation5]
        %205 = vst [vmem:[%s204] sm:$0x3] %v203
        %s206 = sand.u32 %s68, 1
        %s207 = scalar_lea.sflag [#allocation4], %s206
        %s208 = sand.u32 %s68, 1
        %s209 = smul.addr %s208, 8
        %s210 = scalar_lea.vmem [#allocation5], %s209
        // Predicated region
        $region29: #{tpu_custom_call.1} parent=23 // pred_check
          %p211 = pneg %p78
        $region30: #{tpu_custom_call.1} parent=23 // pred_check_branch
          %213 = sbr.rel (%p211) target = $region32
        $region31: #{tpu_custom_call.1} parent=23 // pred_region
          %215 = vsyncadd %s207, 0
          %s216 = smul.addr %s22, 4
          %s217 = sadd.s32 %s23, %s216
          %s218 = smul.addr %s217, 2
          %s219 = scalar_lea.hbm %s1, %s218
          %s220 = sshll.u32 %s210, 4
          %s221 = int_to_ptr.vmem [resolvable:$true] %s220
          %s222 = sshll.u32 %s219, 4
          %s223 = int_to_ptr.hbm [resolvable:$true] %s222
          %228 = dma.vmem_to_hbm [thread:$0]  %s221, 128, %s223, %s207, 32, 32, 2
        $region32: #{tpu_custom_call.1} parent=23 // pred_fallthru
          _
      $region24: #{tpu_custom_call.1} parent=5 // pred_fallthru
        _
      %p229 = scmp.le.s32.totalorder 2, %s13
      // Predicated region
      $region33: #{tpu_custom_call.1} parent=5 // pred_check
        %p230 = pneg %p229
      $region34: #{tpu_custom_call.1} parent=5 // pred_check_branch
        %232 = sbr.rel (%p230) target = $region36
      $region35: #{tpu_custom_call.1} parent=5 // pred_region
        %s233 = ssub.s32 %s13, 2
        // Predicated region
        $region37: #{tpu_custom_call.1} parent=35 // pred_check
          %p234 = pneg %p84
        $region38: #{tpu_custom_call.1} parent=35 // pred_check_branch
          %236 = sbr.rel (%p234) target = $region40
        $region39: #{tpu_custom_call.1} parent=35 // pred_region
          %s237 = sand.u32 %s69, 1
          %s238 = scalar_lea.sflag [#allocation4], %s237
          %s239 = sand.u32 %s69, 1
          %s240 = smul.addr %s239, 8
          %s241 = scalar_lea.vmem [#allocation5], %s240
          %243 = dma.done %s238, 128
        $region40: #{tpu_custom_call.1} parent=35 // pred_fallthru
          _
      $region36: #{tpu_custom_call.1} parent=5 // pred_fallthru
        _
    $region6: #{tpu_custom_call.1} parent=1 // loop_footer
      %s17 = sadd.s32 1, %s13
    $region7: #{tpu_custom_call.1} parent=1 // loop_footer_branch
      %12 = sbr.rel target = $region3
    $region8: #{tpu_custom_call.1} parent=1 // loop_exit
      _
    %244 = vsyncpa [#allocation3], 1
    %s245 = scalar_lea.sflag [#allocation3], 1
    %246 = vsyncpa %s245, 1
    %247 = vsyncpa [#allocation4], 1
    %s248 = scalar_lea.sflag [#allocation4], 1
    %249 = vsyncpa %s248, 1

</llo_original>
